<compile_context>
chip_gen: v7x
topology: tpu7x:2x2x1
jax: 0.10.0
libtpu: 0.0.40
codegen_flags: <defaults>
</compile_context>

<pallas_src>
import math

import jax
import jax.numpy as jnp
from jax.experimental import pallas as pl
from jax.experimental.pallas import tpu as pltpu


def _scale_kernel(x_ref, a_ref, o_ref):
    # a_ref is either a full (tr, C) tile (lane-dense path) or a (1, feat) row
    # (natural-layout path); jnp broadcasting covers both.  alpha is f32, so the
    # multiply runs in f32 on every TPU generation.
    o_ref[...] = (x_ref[...] * a_ref[...]).astype(o_ref.dtype)


def _cdiv(a, b):
    return -(-a // b)


def _sublane_align(dtype):
    return {1: 32, 2: 16, 4: 8}.get(jnp.dtype(dtype).itemsize, 8)


def _pick_block_rows(total_rows, unit, target_rows):
    """Rows per block: multiple of `unit`, <= total_rows, ~target_rows, and
    split into >= 2 blocks when possible (v7x megacore sharding)."""
    if total_rows < 2 * unit:
        return total_rows                        # single full-extent block
    rows = unit * max(1, min(target_rows // unit, total_rows // unit))
    if _cdiv(total_rows, rows) < 2:
        rows = unit * max(1, total_rows // (2 * unit))
    return rows


def _alpha_vector(t, mapping_size, T, d):
    # Same formula as the PyTorch module ((t - tau*k)/tau, not t/tau - k) so the
    # result matches the reference to the last ulp.
    tau = 2.0 * mapping_size / T
    k = jnp.arange(mapping_size, dtype=jnp.float32)
    enc = jnp.clip((jnp.float32(t) - tau * k) / tau, 0.0, 1.0)
    return jnp.concatenate([jnp.ones((d,), jnp.float32), enc, enc], axis=0)


def progressive_encoding(x, t, *, mapping_size, T, d=3, apply_pe=True,
                         lane_block=512, target_block_bytes=2 << 20):
    """x: (N, d + 2*mapping_size); t: python-int / int scalar step counter."""
    N, feat = x.shape
    assert feat == d + 2 * mapping_size

    if not apply_pe:
        # alpha == ones -> identity; skip the kernel (and an HBM round trip).
        return x

    alpha_vec = _alpha_vector(t, mapping_size, T, d)          # (feat,) f32
    itemsize = jnp.dtype(x.dtype).itemsize
    align = _sublane_align(x.dtype)
    L = N * feat
    C = lane_block

    if L % C == 0:
        # ---- lane-dense path: copy-free (N, feat) -> (R, C) reshape ----
        R = L // C
        period = feat // math.gcd(feat, C)                     # tr % period == 0 <=> tr*C % feat == 0
        unit = (period * align) // math.gcd(period, align)     # lcm(period, align)
        target_rows = max(1, target_block_bytes // (C * itemsize))
        tr = _pick_block_rows(R, unit, target_rows)
        # tr == R (single block, R*C == N*feat) or tr % unit == 0; either way
        # tr*C % feat == 0, so one alpha tile is exact for every block.
        reps = (tr * C) // feat
        alpha = jnp.tile(alpha_vec, reps).reshape(tr, C)
        grid = (_cdiv(R, tr),)
        x_in = x.reshape(R, C)
        in_specs = [pl.BlockSpec((tr, C), lambda i: (i, 0)),
                    pl.BlockSpec((tr, C), lambda i: (0, 0))]   # resident alpha tile
        out_specs = pl.BlockSpec((tr, C), lambda i: (i, 0))
        out_shape = jax.ShapeDtypeStruct((R, C), x.dtype)
        x_block_vmem = tr * C * itemsize
        a_block_vmem = tr * C * 4
        reshape_back = lambda o: o.reshape(N, feat)
    else:
        # ---- natural-layout fallback: copy-free, no pad/slice ----
        lanes_padded = _cdiv(feat, 128) * 128                  # VMEM pads lanes to 128
        target_rows = max(align, target_block_bytes // (lanes_padded * itemsize))
        tn = _pick_block_rows(N, align, target_rows)
        alpha = alpha_vec.reshape(1, feat)
        grid = (_cdiv(N, tn),)
        x_in = x
        in_specs = [pl.BlockSpec((tn, feat), lambda i: (i, 0)),
                    pl.BlockSpec((1, feat), lambda i: (0, 0))]  # resident alpha row
        out_specs = pl.BlockSpec((tn, feat), lambda i: (i, 0))
        out_shape = jax.ShapeDtypeStruct((N, feat), x.dtype)
        x_block_vmem = tn * lanes_padded * itemsize
        a_block_vmem = 8 * lanes_padded * 4
        reshape_back = lambda o: o

    # 2 input + 2 output buffers (double-buffered) + resident alpha + slack.
    vmem_limit = int(min(48 << 20,
                         max(4 << 20, 4 * x_block_vmem + 2 * a_block_vmem + (2 << 20))))

    out = pl.pallas_call(
        _scale_kernel,
        out_shape=out_shape,
        grid=grid,
        in_specs=in_specs,
        out_specs=out_specs,
        compiler_params=pltpu.CompilerParams(
            dimension_semantics=("parallel",),
            vmem_limit_bytes=vmem_limit,
        ),
        cost_estimate=pl.CostEstimate(
            flops=2 * L,
            transcendentals=0,
            bytes_accessed=2 * L * itemsize + int(alpha.size) * 4,
        ),
    )(x_in, alpha)

    return reshape_back(out)


def progressive_encoding_ref(x, t, *, mapping_size, T, d=3, apply_pe=True):
    tau = 2.0 * mapping_size / T
    idx = jnp.arange(mapping_size, dtype=jnp.float32)
    alpha = jnp.clip((t - tau * idx) / tau, 0.0, 1.0)
    alpha = jnp.tile(alpha, 2)
    if not apply_pe:
        alpha = jnp.ones_like(alpha)
    alpha = jnp.concatenate([jnp.ones((d,), jnp.float32), alpha], axis=0)
    return x * alpha


if __name__ == "__main__":
    key = jax.random.PRNGKey(0)
    k1, k2, k3, k4 = jax.random.split(key, 4)

    mapping_size = 16   # n
    T = 8
    d = 3
    feat = d + 2 * mapping_size   # 35

    ok = True

    # Case 1: lane-dense, single full-extent block (N*feat % 512 == 0, R = 35).
    x1 = jax.random.normal(k1, (512, feat), dtype=jnp.float32)
    for step in (0, 1, 3, 7):
        out = jax.block_until_ready(progressive_encoding(
            x1, step, mapping_size=mapping_size, T=T, d=d))
        ref = progressive_encoding_ref(x1, step, mapping_size=mapping_size, T=T, d=d)
        ok = ok and bool(jnp.allclose(out, ref, atol=1e-6, rtol=1e-6))

    # Case 2: lane-dense, multi-block grid with resident periodic alpha tile
    # (lane_block=128 -> R=560, two (280, 128) blocks sharded across cores).
    x2 = jax.random.normal(k2, (2048, feat), dtype=jnp.float32)
    out = jax.block_until_ready(progressive_encoding(
        x2, 5, mapping_size=mapping_size, T=T, d=d, lane_block=128))
    ref = progressive_encoding_ref(x2, 5, mapping_size=mapping_size, T=T, d=d)
    ok = ok and bool(jnp.allclose(out, ref, atol=1e-6, rtol=1e-6))

    # Case 3: lane-dense, multi-block with a ragged (masked) last block
    # (N=2176 -> R=595, tr=560, grid=2, last block has 35 valid rows).
    x3 = jax.random.normal(k3, (2176, feat), dtype=jnp.float32)
    out = jax.block_until_ready(progressive_encoding(
        x3, 2, mapping_size=mapping_size, T=T, d=d, lane_block=128))
    ref = progressive_encoding_ref(x3, 2, mapping_size=mapping_size, T=T, d=d)
    ok = ok and bool(jnp.allclose(out, ref, atol=1e-6, rtol=1e-6))

    # Case 4: natural-layout fallback (N*feat not divisible by lane_block);
    # copy-free, ragged last row-block.
    x4 = jax.random.normal(k4, (257, feat), dtype=jnp.float32)
    out = jax.block_until_ready(progressive_encoding(
        x4, 5, mapping_size=mapping_size, T=T, d=d))
    ref = progressive_encoding_ref(x4, 5, mapping_size=mapping_size, T=T, d=d)
    ok = ok and bool(jnp.allclose(out, ref, atol=1e-6, rtol=1e-6))

    # Case 5: apply_pe=False short-circuit (identity, no kernel launch).
    out = jax.block_until_ready(progressive_encoding(
        x1, 2, mapping_size=mapping_size, T=T, d=d, apply_pe=False))
    ref = progressive_encoding_ref(x1, 2, mapping_size=mapping_size, T=T, d=d,
                                   apply_pe=False)
    ok = ok and bool(jnp.allclose(out, ref, atol=1e-6, rtol=1e-6))

    print("KERNEL_OK" if ok else "MISMATCH")
</pallas_src>

<mosaic_0001>
module attributes {stable_mosaic.version = 11 : i64} {
  func.func @_scale_kernel(%arg0: i32, %arg1: memref<35x512xf32, #tpu.memory_space<vmem>>, %arg2: memref<35x512xf32, #tpu.memory_space<vmem>>, %arg3: memref<35x512xf32, #tpu.memory_space<vmem>>) attributes {dimension_semantics = [#tpu.dimension_semantics<parallel>], iteration_bounds = array<i64: 1>, scalar_prefetch = 0 : i64, scratch_operands = 0 : i64, tpu.core_type = #tpu.core_type<tc>, window_params = [{transform_indices = @transform_0, window_bounds = array<i64: 35, 512>}, {pipeline_mode = #tpu.pipeline_mode<synchronous>, transform_indices = @transform_1, window_bounds = array<i64: 35, 512>}, {transform_indices = @transform_2, window_bounds = array<i64: 35, 512>}]} {
    %c0 = arith.constant 0 : index
    %c0_0 = arith.constant 0 : index
    %0 = vector.load %arg1[%c0, %c0_0] : memref<35x512xf32, #tpu.memory_space<vmem>>, vector<35x512xf32>
    %c0_1 = arith.constant 0 : index
    %c0_2 = arith.constant 0 : index
    %1 = vector.load %arg2[%c0_1, %c0_2] : memref<35x512xf32, #tpu.memory_space<vmem>>, vector<35x512xf32>
    %2 = arith.mulf %0, %1 : vector<35x512xf32>
    %c0_3 = arith.constant 0 : index
    %c0_4 = arith.constant 0 : index
    %3 = vector.load %arg3[%c0_3, %c0_4] : memref<35x512xf32, #tpu.memory_space<vmem>>, vector<35x512xf32>
    tpu.vector_store %arg3[%c0_3, %c0_4], %2 {strides = array<i32>} : memref<35x512xf32, #tpu.memory_space<vmem>>, vector<35x512xf32>,
    return
  }
  func.func @transform_0(%arg0: i32) -> (i32, i32) {
    %c0_i32 = arith.constant 0 : i32
    %c0_i32_0 = arith.constant 0 : i32
    return %arg0, %c0_i32 : i32, i32
  }
  func.func @transform_1(%arg0: i32) -> (i32, i32) {
    %c0_i32 = arith.constant 0 : i32
    %c0_i32_0 = arith.constant 0 : i32
    %c0_i32_1 = arith.constant 0 : i32
    return %c0_i32, %c0_i32_0 : i32, i32
  }
  func.func @transform_2(%arg0: i32) -> (i32, i32) {
    %c0_i32 = arith.constant 0 : i32
    %c0_i32_0 = arith.constant 0 : i32
    return %arg0, %c0_i32 : i32, i32
  }
}

</mosaic_0001>

<llo_original>
// kernel: tpu_custom_call.1
$region0: #{tpu_custom_call.1}
  #allocation0 [shape = 'u32[]', space=smem, size = 0x4, offset = 0x4, fixed_abs, tag = 'smem constant byte address 0x4 - core index']
  #allocation1 [shape = 'u32[144,128]{1,0:T(1,128)}', space=vmem, size = 0x12000, scoped, tag = 'internal scratch']
  %s0 = inlined_call_operand.hbm [shape: f32[35,512], index: 0, kind: input, shape index: {}]
  %s1 = inlined_call_operand.hbm [shape: f32[35,512], index: 1, kind: input, shape index: {}]
  %s2 = inlined_call_operand.hbm [shape: f32[35,512], index: 2, kind: output, shape index: {}]
  %s3 = sld [smem:[#allocation0]]
  $region26: #{tpu_custom_call.1} parent=0
    _
  %s5 = ssub.s32 1, %s3
  %s6 = scalar_select 0, %s5, %s3
  $region1: #{tpu_custom_call.1} parent=0
    #allocation2 [shape = 'u8[81920]{0}', space=vmem, size = 0x14000, scoped, tag = 'input window, operand 0, single buffered']
    #allocation3 [shape = 's32[1]{0}', space=sflag, size = 0x4, scoped, tag = 'scoped memory for tpu_custom_call.1']
    #allocation4 [shape = 's32[1]{0}', space=sflag, size = 0x4, scoped, tag = 'scoped memory for tpu_custom_call.1']
    #allocation5 [shape = 'u8[81920]{0}', space=vmem, size = 0x14000, scoped, tag = 'input window, operand 1, single buffered']
    #allocation6 [shape = 's32[1]{0}', space=sflag, size = 0x4, scoped, tag = 'scoped memory for tpu_custom_call.1']
    #allocation7 [shape = 'u8[81920]{0}', space=vmem, size = 0x14000, scoped, tag = 'output window, operand 0, single buffered']
    %7 = vsyncpa [#allocation3], 0
    %8 = vsyncpa [#allocation6], 0
    %9 = vsyncpa [#allocation4], 0
    // Predicated region
    $region2: #{tpu_custom_call.1} parent=1 // pred_check
      _
    $region3: #{tpu_custom_call.1} parent=1 // pred_check_branch
      %11 = sbr.rel (0) target = $region5
    $region4: #{tpu_custom_call.1} parent=1 // pred_region
      %s13 = ssub.s32 2560, 2560
      %14 = vsyncadd [#allocation3], %s13
      %s15 = sshll.u32 [#allocation2], 4
      %s16 = int_to_ptr.vmem [resolvable:$true] %s15
      %21 = dma.hbm_to_vmem [thread:$0]  %s0, 2560, %s16, [#allocation3], 512, 512, 32
    $region5: #{tpu_custom_call.1} parent=1 // pred_fallthru
      _
    // Predicated region
    $region6: #{tpu_custom_call.1} parent=1 // pred_check
      _
    $region7: #{tpu_custom_call.1} parent=1 // pred_check_branch
      %23 = sbr.rel (0) target = $region9
    $region8: #{tpu_custom_call.1} parent=1 // pred_region
      %s25 = ssub.s32 2560, 2560
      %26 = vsyncadd [#allocation6], %s25
      %s27 = sshll.u32 [#allocation5], 4
      %s28 = int_to_ptr.vmem [resolvable:$true] %s27
      %33 = dma.hbm_to_vmem [thread:$0]  %s1, 2560, %s28, [#allocation6], 512, 512, 32
    $region9: #{tpu_custom_call.1} parent=1 // pred_fallthru
      _
    // Predicated region
    $region10: #{tpu_custom_call.1} parent=1 // pred_check
      _
    $region11: #{tpu_custom_call.1} parent=1 // pred_check_branch
      %35 = sbr.rel (0) target = $region13
    $region12: #{tpu_custom_call.1} parent=1 // pred_region
      %36 = dma.done [#allocation3], 2560
    $region13: #{tpu_custom_call.1} parent=1 // pred_fallthru
      _
    // Predicated region
    $region14: #{tpu_custom_call.1} parent=1 // pred_check
      _
    $region15: #{tpu_custom_call.1} parent=1 // pred_check_branch
      %38 = sbr.rel (0) target = $region17
    $region16: #{tpu_custom_call.1} parent=1 // pred_region
      %39 = dma.done [#allocation6], 2560
    $region17: #{tpu_custom_call.1} parent=1 // pred_fallthru
      _
    %v40 = vld [vmem:[#allocation2] sm:$0xff]
    %v41 = vld [vmem:[#allocation2 + $0x8] sm:$0xff]
    %v42 = vld [vmem:[#allocation2 + $0x10] sm:$0xff]
    %v43 = vld [vmem:[#allocation2 + $0x18] sm:$0xff]
    %v44 = vld [vmem:[#allocation2 + $0x20] sm:$0xff]
    %v45 = vld [vmem:[#allocation2 + $0x28] sm:$0xff]
    %v46 = vld [vmem:[#allocation2 + $0x30] sm:$0xff]
    %v47 = vld [vmem:[#allocation2 + $0x38] sm:$0xff]
    %v48 = vld [vmem:[#allocation2 + $0x40] sm:$0xff]
    %v49 = vld [vmem:[#allocation2 + $0x48] sm:$0xff]
    %v50 = vld [vmem:[#allocation2 + $0x50] sm:$0xff]
    %v51 = vld [vmem:[#allocation2 + $0x58] sm:$0xff]
    %v52 = vld [vmem:[#allocation2 + $0x60] sm:$0xff]
    %v53 = vld [vmem:[#allocation2 + $0x68] sm:$0xff]
    %v54 = vld [vmem:[#allocation2 + $0x70] sm:$0xff]
    %v55 = vld [vmem:[#allocation2 + $0x78] sm:$0xff]
    %v56 = vld [vmem:[#allocation2 + $0x80] sm:$0x7]
    %v57 = vld [vmem:[#allocation2 + $0x88] sm:$0x7]
    %v58 = vld [vmem:[#allocation2 + $0x90] sm:$0x7]
    %v59 = vld [vmem:[#allocation2 + $0x98] sm:$0x7]
    %v60 = vld [vmem:[#allocation5] sm:$0xff]
    %v61 = vld [vmem:[#allocation5 + $0x8] sm:$0xff]
    %v62 = vld [vmem:[#allocation5 + $0x10] sm:$0xff]
    %v63 = vld [vmem:[#allocation5 + $0x18] sm:$0xff]
    %v64 = vld [vmem:[#allocation5 + $0x20] sm:$0xff]
    %v65 = vld [vmem:[#allocation5 + $0x28] sm:$0xff]
    %v66 = vld [vmem:[#allocation5 + $0x30] sm:$0xff]
    %v67 = vld [vmem:[#allocation5 + $0x38] sm:$0xff]
    %v68 = vld [vmem:[#allocation5 + $0x40] sm:$0xff]
    %v69 = vld [vmem:[#allocation5 + $0x48] sm:$0xff]
    %v70 = vld [vmem:[#allocation5 + $0x50] sm:$0xff]
    %v71 = vld [vmem:[#allocation5 + $0x58] sm:$0xff]
    %v72 = vld [vmem:[#allocation5 + $0x60] sm:$0xff]
    %v73 = vld [vmem:[#allocation5 + $0x68] sm:$0xff]
    %v74 = vld [vmem:[#allocation5 + $0x70] sm:$0xff]
    %v75 = vld [vmem:[#allocation5 + $0x78] sm:$0xff]
    %v76 = vld [vmem:[#allocation5 + $0x80] sm:$0x7]
    %v77 = vld [vmem:[#allocation5 + $0x88] sm:$0x7]
    %v78 = vld [vmem:[#allocation5 + $0x90] sm:$0x7]
    %v79 = vld [vmem:[#allocation5 + $0x98] sm:$0x7]
    %v80 = vmul.f32 %v40, %v60
    %v81 = vmul.f32 %v41, %v61
    %v82 = vmul.f32 %v42, %v62
    %v83 = vmul.f32 %v43, %v63
    %v84 = vmul.f32 %v44, %v64
    %v85 = vmul.f32 %v45, %v65
    %v86 = vmul.f32 %v46, %v66
    %v87 = vmul.f32 %v47, %v67
    %v88 = vmul.f32 %v48, %v68
    %v89 = vmul.f32 %v49, %v69
    %v90 = vmul.f32 %v50, %v70
    %v91 = vmul.f32 %v51, %v71
    %v92 = vmul.f32 %v52, %v72
    %v93 = vmul.f32 %v53, %v73
    %v94 = vmul.f32 %v54, %v74
    %v95 = vmul.f32 %v55, %v75
    %v96 = vmul.f32 %v56, %v76
    %v97 = vmul.f32 %v57, %v77
    %v98 = vmul.f32 %v58, %v78
    %v99 = vmul.f32 %v59, %v79
    %100 = vst [vmem:[#allocation7] sm:$0xff] %v80
    %101 = vst [vmem:[#allocation7 + $0x8] sm:$0xff] %v81
    %102 = vst [vmem:[#allocation7 + $0x10] sm:$0xff] %v82
    %103 = vst [vmem:[#allocation7 + $0x18] sm:$0xff] %v83
    %104 = vst [vmem:[#allocation7 + $0x20] sm:$0xff] %v84
    %105 = vst [vmem:[#allocation7 + $0x28] sm:$0xff] %v85
    %106 = vst [vmem:[#allocation7 + $0x30] sm:$0xff] %v86
    %107 = vst [vmem:[#allocation7 + $0x38] sm:$0xff] %v87
    %108 = vst [vmem:[#allocation7 + $0x40] sm:$0xff] %v88
    %109 = vst [vmem:[#allocation7 + $0x48] sm:$0xff] %v89
    %110 = vst [vmem:[#allocation7 + $0x50] sm:$0xff] %v90
    %111 = vst [vmem:[#allocation7 + $0x58] sm:$0xff] %v91
    %112 = vst [vmem:[#allocation7 + $0x60] sm:$0xff] %v92
    %113 = vst [vmem:[#allocation7 + $0x68] sm:$0xff] %v93
    %114 = vst [vmem:[#allocation7 + $0x70] sm:$0xff] %v94
    %115 = vst [vmem:[#allocation7 + $0x78] sm:$0xff] %v95
    %116 = vst [vmem:[#allocation7 + $0x80] sm:$0x7] %v96
    %117 = vst [vmem:[#allocation7 + $0x88] sm:$0x7] %v97
    %118 = vst [vmem:[#allocation7 + $0x90] sm:$0x7] %v98
    %119 = vst [vmem:[#allocation7 + $0x98] sm:$0x7] %v99
    // Predicated region
    $region18: #{tpu_custom_call.1} parent=1 // pred_check
      _
    $region19: #{tpu_custom_call.1} parent=1 // pred_check_branch
      %121 = sbr.rel (0) target = $region21
    $region20: #{tpu_custom_call.1} parent=1 // pred_region
      %s123 = ssub.s32 2560, 2560
      %124 = vsyncadd [#allocation4], %s123
      %s125 = sshll.u32 [#allocation7], 4
      %s126 = int_to_ptr.vmem [resolvable:$true] %s125
      %131 = dma.vmem_to_hbm [thread:$0]  %s126, 2560, %s2, [#allocation4], 512, 512, 32
    $region21: #{tpu_custom_call.1} parent=1 // pred_fallthru
      _
    // Predicated region
    $region22: #{tpu_custom_call.1} parent=1 // pred_check
      _
    $region23: #{tpu_custom_call.1} parent=1 // pred_check_branch
      %133 = sbr.rel (0) target = $region25
    $region24: #{tpu_custom_call.1} parent=1 // pred_region
      %134 = dma.done [#allocation4], 2560
    $region25: #{tpu_custom_call.1} parent=1 // pred_fallthru
      _
    %135 = vsyncpa [#allocation3], 1
    %136 = vsyncpa [#allocation6], 1
    %137 = vsyncpa [#allocation4], 1

</llo_original>
